<compile_context>
chip_gen: v6e
topology: v6e:2x2x1
jax: 0.10.0
libtpu: 0.0.40
codegen_flags: <defaults>
</compile_context>

<pallas_src>
import jax
import jax.numpy as jnp
from jax.experimental import pallas as pl
from jax.experimental.pallas import tpu as pltpu


def _round_up(x, m):
    return ((x + m - 1) // m) * m


def _chip_budgets():
    """(pipeline_vmem_budget_bytes, vmem_limit_bytes) tuned per chip generation."""
    vmem_cap = None
    try:
        vmem_cap = int(pltpu.get_tpu_info().vmem_capacity_bytes)
    except Exception:
        vmem_cap = None
    if vmem_cap is not None and vmem_cap >= 96 * 1024 * 1024:
        # v5e / v6e: 128 MiB physical VMEM -> multi-MiB tiles, 64 MiB scoped limit.
        return 40 * 1024 * 1024, 64 * 1024 * 1024
    # v7x (64 MiB physical VMEM) or unknown chip: stay conservative.
    return 24 * 1024 * 1024, 40 * 1024 * 1024


def _num_tensorcores():
    """TensorCores per chip (v7x = 2). Defaults to 1 if it cannot be determined."""
    try:
        info = pltpu.get_tpu_info()
        for attr in ("num_cores", "num_tensorcores", "tensorcore_count",
                     "cores_per_chip", "num_cores_per_chip"):
            n = getattr(info, attr, None)
            if n:
                return max(1, int(n))
    except Exception:
        pass
    return 1


def _pick_block_rows(batch, feat, itemsize_1, itemsize_2, pipeline_budget):
    """Rows per tile from the VMEM byte budget, using lane-padded accounting."""
    lanes = _round_up(max(1, feat), 128)          # lane-padded width in VMEM
    # Per tile row: 2 inputs x 2 pipeline buffers (at HBM dtype), one (tb,1)
    # f32 accumulator row (512 B lane-padded) and a worst-case double-buffered
    # (tb,1) distance row (1024 B).
    per_row = 2 * lanes * (itemsize_1 + itemsize_2) + 512 + 1024
    rows = max(8, pipeline_budget // per_row)

    # Sublane-packing alignment: 8 rows (4-byte), 16 (2-byte), 32 (1-byte).
    align = {4: 8, 2: 16, 1: 32}.get(min(itemsize_1, itemsize_2), 8)
    if rows >= 512:
        rows = (rows // 512) * 512                # 512 is a multiple of 8/16/32
    else:
        rows = max(align, (rows // align) * align)
    rows = min(rows, _round_up(batch, align))     # never tile past the batch
    return int(rows), int(align)


def _make_kernel(resident_distance):
    def kernel(v1_ref, v2_ref, d_ref, out_ref, acc_ref):
        c = pl.program_id(0)
        i = pl.program_id(1)
        ni = pl.num_programs(1)
        tb = acc_ref.shape[0]

        @pl.when(i == 0)
        def _init():
            acc_ref[...] = jnp.zeros_like(acc_ref)

        if resident_distance:
            # Whole (padded) distance column lives in VMEM; slice this tile's rows.
            row_start = pl.multiple_of((c * ni + i) * tb, 8)
            d_blk = d_ref[pl.ds(row_start, tb), :]
        else:
            d_blk = d_ref[...]

        # Upcast in-kernel (bf16 in HBM -> half the DMA bytes, math in f32).
        diff = v1_ref[...].astype(jnp.float32) - v2_ref[...].astype(jnp.float32)
        sim = jnp.sum(diff * diff, axis=1, keepdims=True)      # (tb, 1) per-row ||.||^2
        err = sim - d_blk.astype(jnp.float32)                  # (tb, 1)
        # Vector accumulator: no per-step cross-sublane reduce-to-scalar.
        acc_ref[...] += err * err

        @pl.when(i == ni - 1)
        def _finalize():
            out_ref[...] = jnp.sum(acc_ref[...], axis=0,
                                   keepdims=True).reshape(1, 1, 1)

    return kernel


def euclidian_distance_loss(vec_1, vec_2, distance, *, block_rows=None):
    """vec_1, vec_2: [B, D] (f32 or bf16); distance: [B]. Returns scalar f32:
       mean_b( (sum_d (vec_1 - vec_2)^2 - distance)^2 )  -- matches the module."""
    B, D = vec_1.shape
    it1 = jnp.dtype(vec_1.dtype).itemsize
    it2 = jnp.dtype(vec_2.dtype).itemsize

    pipeline_budget, vmem_limit = _chip_budgets()
    tb, align = _pick_block_rows(B, D, it1, it2, pipeline_budget)
    if block_rows is not None:
        tb = max(align, (int(block_rows) // align) * align)

    nc = _num_tensorcores()                      # 1 on v5e/v6e, 2 on v7x
    chunk = tb * nc
    bp = _round_up(B, chunk)                     # padded batch
    grid_i = bp // chunk

    d2 = distance.astype(jnp.float32).reshape(B, 1)
    pad = bp - B
    if pad:
        # Zero rows contribute exactly 0 (sim = 0, distance = 0 -> err = 0).
        vec_1 = jnp.pad(vec_1, ((0, pad), (0, 0)))
        vec_2 = jnp.pad(vec_2, ((0, pad), (0, 0)))
        d2 = jnp.pad(d2, ((0, pad), (0, 0)))

    # Keep the distance column resident in VMEM unless its (lane-padded,
    # double-buffered) footprint would exceed ~8 MiB; then stream per-tile.
    resident = bp * 512 * 2 <= 8 * 1024 * 1024

    row_map = lambda c, i: (c * grid_i + i, 0)
    if resident:
        d_spec = pl.BlockSpec((bp, 1), lambda c, i: (0, 0))
    else:
        d_spec = pl.BlockSpec((tb, 1), row_map)

    if nc > 1:
        # Only CORE_PARALLEL reliably splits the grid across TensorCores.
        sems = (pltpu.CORE_PARALLEL, pltpu.ARBITRARY)
    else:
        sems = ("arbitrary", "arbitrary")

    cost = pl.CostEstimate(
        flops=3 * B * D + 3 * B,
        transcendentals=0,
        bytes_accessed=B * D * (it1 + it2) + B * 4 + 4,
    )

    partials = pl.pallas_call(
        _make_kernel(resident),
        out_shape=jax.ShapeDtypeStruct((nc, 1, 1), jnp.float32),
        grid_spec=pltpu.PrefetchScalarGridSpec(
            num_scalar_prefetch=0,
            grid=(nc, grid_i),
            in_specs=[
                pl.BlockSpec((tb, D), row_map),
                pl.BlockSpec((tb, D), row_map),
                d_spec,
            ],
            out_specs=pl.BlockSpec((1, 1, 1), lambda c, i: (c, 0, 0)),
            scratch_shapes=[pltpu.VMEM((tb, 1), jnp.float32)],
        ),
        compiler_params=pltpu.CompilerParams(
            dimension_semantics=sems,
            vmem_limit_bytes=vmem_limit,
        ),
        cost_estimate=cost,
    )(vec_1, vec_2, d2)

    # Tiny epilogue in plain JAX: sum per-core partials, then mse_loss's mean (1/B).
    return jnp.sum(partials) / jnp.float32(B)


if __name__ == "__main__":
    key = jax.random.PRNGKey(0)
    k1, k2, k3, k4, k5, k6 = jax.random.split(key, 6)

    # Case 1: small f32 embedding batch (shapes consistent with the module).
    B, D = 8, 32
    v1 = jax.random.normal(k1, (B, D), dtype=jnp.float32)
    v2 = jax.random.normal(k2, (B, D), dtype=jnp.float32)
    dist = jax.random.uniform(k3, (B,), dtype=jnp.float32) * 10.0

    loss = jax.block_until_ready(euclidian_distance_loss(v1, v2, dist))
    sim_ref = jnp.sum((v1 - v2) ** 2, axis=1)
    loss_ref = jnp.mean((sim_ref - dist) ** 2)
    assert jnp.allclose(loss, loss_ref, rtol=1e-5, atol=1e-5), (loss, loss_ref)

    # Case 2: bf16 inputs + batch needing zero-padding (exercises tiling path).
    B2, D2 = 50, 96
    v1b = jax.random.normal(k4, (B2, D2), dtype=jnp.bfloat16)
    v2b = jax.random.normal(k5, (B2, D2), dtype=jnp.bfloat16)
    distb = jax.random.uniform(k6, (B2,), dtype=jnp.float32) * 10.0

    loss2 = jax.block_until_ready(euclidian_distance_loss(v1b, v2b, distb))
    sim2_ref = jnp.sum((v1b.astype(jnp.float32) - v2b.astype(jnp.float32)) ** 2, axis=1)
    loss2_ref = jnp.mean((sim2_ref - distb) ** 2)
    assert jnp.allclose(loss2, loss2_ref, rtol=1e-4, atol=1e-4), (loss2, loss2_ref)

    print("KERNEL_OK")
</pallas_src>

<mosaic_0001>
module attributes {stable_mosaic.version = 11 : i64} {
  func.func @kernel(%arg0: i32, %arg1: i32, %arg2: memref<8x32xf32, #tpu.memory_space<vmem>>, %arg3: memref<8x32xf32, #tpu.memory_space<vmem>>, %arg4: memref<8x1xf32, #tpu.memory_space<vmem>>, %arg5: memref<1x1x1xf32, #tpu.memory_space<vmem>>, %arg6: memref<8x1xf32, #tpu.memory_space<vmem>>) attributes {dimension_semantics = [#tpu.dimension_semantics<arbitrary>, #tpu.dimension_semantics<arbitrary>], iteration_bounds = array<i64: 1, 1>, scalar_prefetch = 0 : i64, scratch_operands = 1 : i64, tpu.core_type = #tpu.core_type<tc>, window_params = [{transform_indices = @transform_0, window_bounds = array<i64: 8, 32>}, {transform_indices = @transform_1, window_bounds = array<i64: 8, 32>}, {pipeline_mode = #tpu.pipeline_mode<synchronous>, transform_indices = @transform_2, window_bounds = array<i64: 8, 1>}, {transform_indices = @transform_3, window_bounds = array<i64: 1, 1, 1>}]} {
    %c0_i32 = arith.constant 0 : i32
    %0 = arith.cmpi eq, %arg1, %c0_i32 : i32
    %1 = arith.extui %0 : i1 to i32
    %c0_i32_0 = arith.constant 0 : i32
    %2 = arith.cmpi ne, %1, %c0_i32_0 : i32
    scf.if %2 {
      %cst_11 = arith.constant 0.000000e+00 : f32
      %23 = vector.broadcast %cst_11 : f32 to vector<8x1xf32>
      %c0_12 = arith.constant 0 : index
      %c0_13 = arith.constant 0 : index
      %24 = vector.load %arg6[%c0_12, %c0_13] : memref<8x1xf32, #tpu.memory_space<vmem>>, vector<8x1xf32>
      tpu.vector_store %arg6[%c0_12, %c0_13], %23 {strides = array<i32>} : memref<8x1xf32, #tpu.memory_space<vmem>>, vector<8x1xf32>,
    } else {
    }
    %c1_i32 = arith.constant 1 : i32
    %3 = arith.muli %arg0, %c1_i32 : i32
    %4 = arith.addi %3, %arg1 : i32
    %c8_i32 = arith.constant 8 : i32
    %5 = arith.muli %4, %c8_i32 : i32
    %6 = tpu.assume_multiple %5, 8 : i32
    %7 = arith.index_cast %6 : i32 to index
    %c0 = arith.constant 0 : index
    %8 = vector.load %arg4[%7, %c0] : memref<8x1xf32, #tpu.memory_space<vmem>>, vector<8x1xf32>
    %c0_1 = arith.constant 0 : index
    %c0_2 = arith.constant 0 : index
    %9 = vector.load %arg2[%c0_1, %c0_2] : memref<8x32xf32, #tpu.memory_space<vmem>>, vector<8x32xf32>
    %c0_3 = arith.constant 0 : index
    %c0_4 = arith.constant 0 : index
    %10 = vector.load %arg3[%c0_3, %c0_4] : memref<8x32xf32, #tpu.memory_space<vmem>>, vector<8x32xf32>
    %11 = arith.subf %9, %10 : vector<8x32xf32>
    %12 = arith.mulf %11, %11 : vector<8x32xf32>
    %cst = arith.constant dense<0.000000e+00> : vector<8xf32>
    %13 = vector.multi_reduction <add>, %12, %cst [1] : vector<8x32xf32> to vector<8xf32>
    %14 = vector.shape_cast %13 : vector<8xf32> to vector<8x1xf32>
    %15 = arith.subf %14, %8 : vector<8x1xf32>
    %c0_5 = arith.constant 0 : index
    %c0_6 = arith.constant 0 : index
    %16 = vector.load %arg6[%c0_5, %c0_6] : memref<8x1xf32, #tpu.memory_space<vmem>>, vector<8x1xf32>
    %17 = arith.mulf %15, %15 : vector<8x1xf32>
    %18 = arith.addf %16, %17 : vector<8x1xf32>
    %c0_7 = arith.constant 0 : index
    %c0_8 = arith.constant 0 : index
    %19 = vector.load %arg6[%c0_7, %c0_8] : memref<8x1xf32, #tpu.memory_space<vmem>>, vector<8x1xf32>
    tpu.vector_store %arg6[%c0_7, %c0_8], %18 {strides = array<i32>} : memref<8x1xf32, #tpu.memory_space<vmem>>, vector<8x1xf32>,
    %c0_i32_9 = arith.constant 0 : i32
    %20 = arith.cmpi eq, %arg1, %c0_i32_9 : i32
    %21 = arith.extui %20 : i1 to i32
    %c0_i32_10 = arith.constant 0 : i32
    %22 = arith.cmpi ne, %21, %c0_i32_10 : i32
    scf.if %22 {
      %c0_11 = arith.constant 0 : index
      %c0_12 = arith.constant 0 : index
      %23 = vector.load %arg6[%c0_11, %c0_12] : memref<8x1xf32, #tpu.memory_space<vmem>>, vector<8x1xf32>
      %cst_13 = arith.constant dense<0.000000e+00> : vector<1xf32>
      %24 = vector.multi_reduction <add>, %23, %cst_13 [0] : vector<8x1xf32> to vector<1xf32>
      %25 = vector.shape_cast %24 : vector<1xf32> to vector<1x1xf32>
      %26 = vector.shape_cast %25 : vector<1x1xf32> to vector<1x1x1xf32>
      %c0_14 = arith.constant 0 : index
      %c0_15 = arith.constant 0 : index
      %c0_16 = arith.constant 0 : index
      %27 = vector.load %arg5[%c0_14, %c0_15, %c0_16] : memref<1x1x1xf32, #tpu.memory_space<vmem>>, vector<1x1x1xf32>
      tpu.vector_store %arg5[%c0_14, %c0_15, %c0_16], %26 {strides = array<i32>} : memref<1x1x1xf32, #tpu.memory_space<vmem>>, vector<1x1x1xf32>,
    } else {
    }
    return
  }
  func.func @transform_0(%arg0: i32, %arg1: i32) -> (i32, i32) {
    %c1_i32 = arith.constant 1 : i32
    %0 = arith.muli %arg0, %c1_i32 : i32
    %1 = arith.addi %0, %arg1 : i32
    %c0_i32 = arith.constant 0 : i32
    %c0_i32_0 = arith.constant 0 : i32
    return %1, %c0_i32 : i32, i32
  }
  func.func @transform_1(%arg0: i32, %arg1: i32) -> (i32, i32) {
    %c1_i32 = arith.constant 1 : i32
    %0 = arith.muli %arg0, %c1_i32 : i32
    %1 = arith.addi %0, %arg1 : i32
    %c0_i32 = arith.constant 0 : i32
    %c0_i32_0 = arith.constant 0 : i32
    return %1, %c0_i32 : i32, i32
  }
  func.func @transform_2(%arg0: i32, %arg1: i32) -> (i32, i32) {
    %c0_i32 = arith.constant 0 : i32
    %c0_i32_0 = arith.constant 0 : i32
    %c0_i32_1 = arith.constant 0 : i32
    return %c0_i32, %c0_i32_0 : i32, i32
  }
  func.func @transform_3(%arg0: i32, %arg1: i32) -> (i32, i32, i32) {
    %c0_i32 = arith.constant 0 : i32
    %c0_i32_0 = arith.constant 0 : i32
    %c0_i32_1 = arith.constant 0 : i32
    return %arg0, %c0_i32, %c0_i32_0 : i32, i32, i32
  }
}

</mosaic_0001>

<llo_original>
// kernel: tpu_custom_call.1
$region0: #{tpu_custom_call.1}
  #allocation0 [shape = 'u32[]', space=smem, size = 0x4, offset = 0x4, fixed_abs, tag = 'smem constant byte address 0x4 - core index']
  #allocation1 [shape = 'u32[144,128]{1,0:T(1,128)}', space=vmem, size = 0x12000, scoped, tag = 'internal scratch']
  #allocation2 [shape = 'f32[8,1]{1,0:T(8,128)}', space=vmem, size = 0x1000, scoped, tag = 'scratch operand']
  %s0 = inlined_call_operand.vmem [shape: f32[8,32], index: 0, kind: input, shape index: {}]
  %s1 = inlined_call_operand.hbm [shape: f32[8,32], index: 1, kind: input, shape index: {}]
  %s2 = inlined_call_operand.vmem [shape: f32[8,1], index: 2, kind: input, shape index: {}]
  %s3 = inlined_call_operand.hbm [shape: f32[1,1,1], index: 3, kind: output, shape index: {}]
  %s4 = sld [smem:[#allocation0]]
  $region34: #{tpu_custom_call.1} parent=0
    _
  %s6 = ssub.s32 1, %s4
  %s7 = scalar_select 0, %s6, %s4
  $region1: #{tpu_custom_call.1} parent=0
    #allocation3 [shape = 'u8[4096]{0}', space=vmem, size = 0x1000, scoped, tag = 'input window, operand 1, single buffered']
    #allocation4 [shape = 's32[1]{0}', space=sflag, size = 0x4, scoped, tag = 'scoped memory for tpu_custom_call.1']
    #allocation5 [shape = 's32[1]{0}', space=sflag, size = 0x4, scoped, tag = 'scoped memory for tpu_custom_call.1']
    #allocation6 [shape = 'u8[512]{0}', space=vmem, size = 0x400, scoped, tag = 'output window, operand 0, single buffered']
    %8 = vsyncpa [#allocation4], 0
    %9 = vsyncpa [#allocation5], 0
    // Predicated region
    $region2: #{tpu_custom_call.1} parent=1 // pred_check
      _
    $region3: #{tpu_custom_call.1} parent=1 // pred_check_branch
      %11 = sbr.rel (0) target = $region5
    $region4: #{tpu_custom_call.1} parent=1 // pred_region
      %s12 = sadd.s32 0, 0
      %p13 = scmp.lt.s32.totalorder %s12, 0
      %s14 = scalar_select %p13, %s12, 0
      %s15 = smul.addr %s14, 8
      %s16 = scalar_lea.vmem %s0, %s15
      %s17 = sadd.s32 0, 0
    $region5: #{tpu_custom_call.1} parent=1 // pred_fallthru
      _
    // Predicated region
    $region6: #{tpu_custom_call.1} parent=1 // pred_check
      _
    $region7: #{tpu_custom_call.1} parent=1 // pred_check_branch
      %19 = sbr.rel (0) target = $region9
    $region8: #{tpu_custom_call.1} parent=1 // pred_region
      %s20 = sadd.s32 0, 0
      %s22 = ssub.s32 128, 128
      %23 = vsyncadd [#allocation4], %s22
      %s24 = smul.addr %s20, 128
      %s25 = scalar_lea.hbm %s1, %s24
      %s27 = sshll.u32 [#allocation3], 4
      %s28 = int_to_ptr.vmem [resolvable:$true] %s27
      %30 = dma.hbm_to_vmem [thread:$0]  %s25, 128, %s28, [#allocation4]
    $region9: #{tpu_custom_call.1} parent=1 // pred_fallthru
      _
    // Predicated region
    $region10: #{tpu_custom_call.1} parent=1 // pred_check
      _
    $region11: #{tpu_custom_call.1} parent=1 // pred_check_branch
      %32 = sbr.rel (0) target = $region13
    $region12: #{tpu_custom_call.1} parent=1 // pred_region
      _
    $region13: #{tpu_custom_call.1} parent=1 // pred_fallthru
      _
    // Predicated region
    $region14: #{tpu_custom_call.1} parent=1 // pred_check
      _
    $region15: #{tpu_custom_call.1} parent=1 // pred_check_branch
      %34 = sbr.rel (0) target = $region17
    $region16: #{tpu_custom_call.1} parent=1 // pred_region
      %35 = dma.done [#allocation4], 128
    $region17: #{tpu_custom_call.1} parent=1 // pred_fallthru
      _
    %s36 = sadd.s32 0, 0
    %p37 = scmp.lt.s32.totalorder %s36, 0
    %s38 = scalar_select %p37, %s36, 0
    %s39 = smul.addr %s38, 8
    %s40 = scalar_lea.vmem %s0, %s39
    %s41 = sadd.s32 0, 0
    %p42 = scmp.lt.s32.totalorder %s41, 0
    %s43 = scalar_select %p42, %s41, 0
    %s44 = smul.addr %s43, 8
    %s45 = scalar_lea.vmem %s0, %s44
    %s46 = sadd.s32 0, 0
    %s47 = sadd.s32 0, 0
    %p48 = scmp.eq.s32.totalorder 0, 0
    // Predicated region
    $region18: #{tpu_custom_call.1} parent=1 // pred_check
      %p49 = pneg %p48
    $region19: #{tpu_custom_call.1} parent=1 // pred_check_branch
      %51 = sbr.rel (%p49) target = $region21
    $region20: #{tpu_custom_call.1} parent=1 // pred_region
      %vm52 = vcmask 7168
      %53 = vst.msk [vmem:[#allocation2] sm:$0xff] %vm52, 0.0
    $region21: #{tpu_custom_call.1} parent=1 // pred_fallthru
      _
    %s54 = sadd.s32 0, 0
    %s55 = smul.u32 %s54, 8
    %s56 = scalar_lea.vmem %s2, %s55
    %v57 = vld [vmem:[%s56] sm:$0xff]
    %v58 = vld [vmem:[%s45] sm:$0xff]
    %v59 = vld [vmem:[#allocation3] sm:$0xff]
    %v60 = vsub.f32 %v58, %v59
    %v61 = vmul.f32 %v60, %v60
    %vm62 = vcmask 261120
    %v63 = vsel %vm62, %v61, 0.0
    %64 = vadd.xlane.f32.xlu0 %v63
    %v65 = vpop.xlane.xlu0 %64
    %v66 = vsub.f32 %v65, %v57
    %v67 = vld [vmem:[#allocation2] sm:$0xff]
    %v68 = vmul.f32 %v66, %v66
    %v69 = vadd.f32 %v67, %v68
    %vm70 = vcmask 7168
    %71 = vst.msk [vmem:[#allocation2] sm:$0xff] %vm70, %v69
    // Predicated region
    $region22: #{tpu_custom_call.1} parent=1 // pred_check
      %p72 = pneg %p48
    $region23: #{tpu_custom_call.1} parent=1 // pred_check_branch
      %74 = sbr.rel (%p72) target = $region25
    $region24: #{tpu_custom_call.1} parent=1 // pred_region
      %v75 = vld [vmem:[#allocation2] sm:$0xff]
      %v76 = vsel %vm70, %v75, 0.0
      %v77 = vrot.slane %v76, 4
      %v78 = vadd.f32 %v76, %v77
      %v79 = vrot.slane %v78, 2
      %v80 = vadd.f32 %v78, %v79
      %v81 = vrot.slane %v80, 1
      %v82 = vadd.f32 %v80, %v81
      %vm83 = vcmask 0
      %84 = vst.msk [vmem:[#allocation6] sm:$0x1] %vm83, %v82
    $region25: #{tpu_custom_call.1} parent=1 // pred_fallthru
      _
    // Predicated region
    $region26: #{tpu_custom_call.1} parent=1 // pred_check
      _
    $region27: #{tpu_custom_call.1} parent=1 // pred_check_branch
      %86 = sbr.rel (0) target = $region29
    $region28: #{tpu_custom_call.1} parent=1 // pred_region
      %s88 = ssub.s32 16, 16
      %89 = vsyncadd [#allocation5], %s88
      %s91 = sshll.u32 [#allocation6], 4
      %s92 = int_to_ptr.vmem [resolvable:$true] %s91
      %94 = dma.vmem_to_hbm [thread:$0]  %s92, 16, %s3, [#allocation5]
    $region29: #{tpu_custom_call.1} parent=1 // pred_fallthru
      _
    // Predicated region
    $region30: #{tpu_custom_call.1} parent=1 // pred_check
      _
    $region31: #{tpu_custom_call.1} parent=1 // pred_check_branch
      %96 = sbr.rel (0) target = $region33
    $region32: #{tpu_custom_call.1} parent=1 // pred_region
      %97 = dma.done [#allocation5], 16
    $region33: #{tpu_custom_call.1} parent=1 // pred_fallthru
      _
    %98 = vsyncpa [#allocation4], 1
    %99 = vsyncpa [#allocation5], 1

</llo_original>
